<compile_context>
chip_gen: v7x
topology: tpu7x:2x2x1
jax: 0.10.0
libtpu: 0.0.40
codegen_flags: <defaults>
</compile_context>

<pallas_src>
import functools

import jax
import jax.numpy as jnp
import numpy as np
from jax.experimental import pallas as pl
from jax.experimental.pallas import tpu as pltpu

SQRT_2_OVER_PI = float(np.sqrt(2.0 / np.pi))
LN_EPS = 1e-6


def _round_up(a, b):
    return (a + b - 1) // b * b


def _ffn_kernel(x_ref, gamma_ref, beta_ref, w1_ref, b1_ref, w2_ref, b2_ref, o_ref,
                *, d_in, d_in_padded):
    # x_ref: (tm, d_in_padded) tile of flattened rows (zero-padded features / rows).
    x = x_ref[...].astype(jnp.float32)

    # ---- LayerNorm over the *true* d_in features (biased variance, like torch.nn.LayerNorm) ----
    if d_in_padded != d_in:
        lane = jax.lax.broadcasted_iota(jnp.int32, x.shape, 1)
        mask = (lane < d_in).astype(jnp.float32)
        xm = x * mask
    else:
        mask = None
        xm = x

    inv_n = 1.0 / float(d_in)
    mean = jnp.sum(xm, axis=-1, keepdims=True) * inv_n
    xc = xm - mean
    if mask is not None:
        xc = xc * mask                      # zero out padded lanes before the variance
    var = jnp.sum(xc * xc, axis=-1, keepdims=True) * inv_n
    inv = jax.lax.rsqrt(var + LN_EPS)
    # padded lanes: xc = 0, gamma = 0, beta = 0  ->  xn = 0 there.
    xn = xc * inv * gamma_ref[...] + beta_ref[...]          # (tm, d_in_padded), f32

    # ---- Linear 1 on the MXU in bf16, f32 accumulation ----
    h = jnp.dot(xn.astype(jnp.bfloat16), w1_ref[...],
                preferred_element_type=jnp.float32) + b1_ref[...]   # (tm, d_hidden_padded)

    # ---- GeLU (tanh approximation, matching the PyTorch GeLU module) ----
    h2 = h * h
    u = h * (1.0 + 0.044715 * h2)
    g = 0.5 * h * (1.0 + jnp.tanh(SQRT_2_OVER_PI * u))

    # ---- Linear 2 ----
    y = jnp.dot(g.astype(jnp.bfloat16), w2_ref[...],
                preferred_element_type=jnp.float32) + b2_ref[...]   # (tm, d_out_padded)

    # ---- residual (x padded lanes are zero, y padded lanes are zero) ----
    o_ref[...] = (y + x).astype(o_ref.dtype)


@functools.partial(jax.jit, static_argnames=("tm",))
def feed_forward(x, gamma, beta, w1, b1, w2, b2, *, tm=256):
    """x: [B, L, d_in] -> [B, L, d_out] with d_out == d_in."""
    B, L, d_in = x.shape
    d_hidden = w1.shape[1]
    d_out = w2.shape[1]
    assert d_out == d_in, "Incorrect in/out sizes!"

    rows = B * L

    # Lane-dense feature padding (multiples of 128).
    d_in_p = _round_up(d_in, 128)
    d_hidden_p = _round_up(d_hidden, 128)
    d_out_p = d_in_p

    # Row tile: large by default, but don't over-pad tiny inputs; keep it a multiple of 8.
    tm_eff = min(tm, _round_up(rows, 8))
    rows_p = _round_up(rows, tm_eff)

    # ---- pad / cast operands (zero padding is mathematically inert, see kernel) ----
    xf = jnp.pad(x.reshape(rows, d_in),
                 ((0, rows_p - rows), (0, d_in_p - d_in)))
    gamma_p = jnp.pad(gamma.reshape(1, d_in).astype(jnp.float32),
                      ((0, 0), (0, d_in_p - d_in)))
    beta_p = jnp.pad(beta.reshape(1, d_in).astype(jnp.float32),
                     ((0, 0), (0, d_in_p - d_in)))
    w1_p = jnp.pad(w1.astype(jnp.bfloat16),
                   ((0, d_in_p - d_in), (0, d_hidden_p - d_hidden)))
    b1_p = jnp.pad(b1.reshape(1, d_hidden).astype(jnp.float32),
                   ((0, 0), (0, d_hidden_p - d_hidden)))
    w2_p = jnp.pad(w2.astype(jnp.bfloat16),
                   ((0, d_hidden_p - d_hidden), (0, d_out_p - d_out)))
    b2_p = jnp.pad(b2.reshape(1, d_out).astype(jnp.float32),
                   ((0, 0), (0, d_out_p - d_out)))

    grid = (rows_p // tm_eff,)

    # Advisory cost estimate for the XLA scheduler.
    flops = 2 * rows_p * d_in_p * d_hidden_p + 2 * rows_p * d_hidden_p * d_out_p
    transcendentals = rows_p * d_hidden_p + rows_p        # tanh + rsqrt
    bytes_accessed = (xf.size * 4 + rows_p * d_out_p * 4
                      + (w1_p.size + w2_p.size) * 2
                      + (gamma_p.size + beta_p.size + b1_p.size + b2_p.size) * 4)
    cost = pl.CostEstimate(flops=flops, transcendentals=transcendentals,
                           bytes_accessed=bytes_accessed)

    # VMEM budget: double-buffered x/out tiles + (double-buffered) bf16 weights + vectors.
    vmem_need = (2 * tm_eff * d_in_p * 4
                 + 2 * tm_eff * d_out_p * 4
                 + 2 * (w1_p.size + w2_p.size) * 2
                 + 4 * (2 * d_in_p + d_hidden_p + d_out_p) * 4)
    vmem_limit = int(min(max(2 * vmem_need, 32 * 1024 * 1024), 48 * 1024 * 1024))

    kernel = functools.partial(_ffn_kernel, d_in=d_in, d_in_padded=d_in_p)

    out = pl.pallas_call(
        kernel,
        out_shape=jax.ShapeDtypeStruct((rows_p, d_out_p), x.dtype),
        grid_spec=pltpu.PrefetchScalarGridSpec(
            num_scalar_prefetch=0,
            grid=grid,
            in_specs=[
                pl.BlockSpec((tm_eff, d_in_p), lambda i: (i, 0)),       # x rows
                pl.BlockSpec((1, d_in_p), lambda i: (0, 0)),            # gamma
                pl.BlockSpec((1, d_in_p), lambda i: (0, 0)),            # beta
                pl.BlockSpec((d_in_p, d_hidden_p), lambda i: (0, 0)),   # W1 (bf16)
                pl.BlockSpec((1, d_hidden_p), lambda i: (0, 0)),        # b1
                pl.BlockSpec((d_hidden_p, d_out_p), lambda i: (0, 0)),  # W2 (bf16)
                pl.BlockSpec((1, d_out_p), lambda i: (0, 0)),           # b2
            ],
            out_specs=pl.BlockSpec((tm_eff, d_out_p), lambda i: (i, 0)),
        ),
        compiler_params=pltpu.CompilerParams(
            dimension_semantics=("parallel",),
            vmem_limit_bytes=vmem_limit,
        ),
        cost_estimate=cost,
    )(xf, gamma_p, beta_p, w1_p, b1_p, w2_p, b2_p)

    return out[:rows, :d_out].reshape(B, L, d_out)


def _reference(x, gamma, beta, w1, b1, w2, b2):
    # Pure-JAX f32 reference of the PyTorch module (eval mode, dropout = identity).
    mean = jnp.mean(x, axis=-1, keepdims=True)
    var = jnp.mean((x - mean) ** 2, axis=-1, keepdims=True)
    xn = (x - mean) * jax.lax.rsqrt(var + LN_EPS) * gamma[0] + beta[0]
    h = xn @ w1 + b1[0]
    g = 0.5 * h * (1.0 + jnp.tanh(SQRT_2_OVER_PI * (h + 0.044715 * h ** 3)))
    y = g @ w2 + b2[0]
    return y + x


if __name__ == "__main__":
    # Shapes consistent with the module: x is [batch, seq_len, d_input]
    batch, seq_len, d_input, d_hidden = 2, 8, 32, 64
    d_output = d_input

    key = jax.random.PRNGKey(0)
    kx, kg, kb, kw1, kb1, kw2, kb2 = jax.random.split(key, 7)

    x = jax.random.normal(kx, (batch, seq_len, d_input), dtype=jnp.float32)

    # Deterministic parameter init (synthetic, not a checkpoint load)
    gamma = jnp.ones((1, d_input), dtype=jnp.float32) + 0.01 * jax.random.normal(kg, (1, d_input))
    beta = 0.01 * jax.random.normal(kb, (1, d_input), dtype=jnp.float32)
    w1 = jax.random.normal(kw1, (d_input, d_hidden), dtype=jnp.float32) / np.sqrt(d_input)
    b1 = 0.01 * jax.random.normal(kb1, (1, d_hidden), dtype=jnp.float32)
    w2 = jax.random.normal(kw2, (d_hidden, d_output), dtype=jnp.float32) / np.sqrt(d_hidden)
    b2 = 0.01 * jax.random.normal(kb2, (1, d_output), dtype=jnp.float32)

    out = feed_forward(x, gamma, beta, w1, b1, w2, b2)
    out = jax.block_until_ready(out)

    ref = _reference(x, gamma, beta, w1, b1, w2, b2)
    # bf16 matmul operands (f32 accumulation) vs f32 reference -> loosened tolerance.
    np.testing.assert_allclose(np.asarray(out), np.asarray(ref), rtol=5e-2, atol=5e-2)

    print("KERNEL_OK")
</pallas_src>

<mosaic_0001>
module attributes {stable_mosaic.version = 11 : i64} {
  func.func @_ffn_kernel(%arg0: i32, %arg1: memref<16x128xf32, #tpu.memory_space<vmem>>, %arg2: memref<1x128xf32, #tpu.memory_space<vmem>>, %arg3: memref<1x128xf32, #tpu.memory_space<vmem>>, %arg4: memref<128x128xbf16, #tpu.memory_space<vmem>>, %arg5: memref<1x128xf32, #tpu.memory_space<vmem>>, %arg6: memref<128x128xbf16, #tpu.memory_space<vmem>>, %arg7: memref<1x128xf32, #tpu.memory_space<vmem>>, %arg8: memref<16x128xf32, #tpu.memory_space<vmem>>) attributes {dimension_semantics = [#tpu.dimension_semantics<parallel>], iteration_bounds = array<i64: 1>, scalar_prefetch = 0 : i64, scratch_operands = 0 : i64, tpu.core_type = #tpu.core_type<tc>, window_params = [{transform_indices = @transform_0, window_bounds = array<i64: 16, 128>}, {pipeline_mode = #tpu.pipeline_mode<synchronous>, transform_indices = @transform_1, window_bounds = array<i64: 1, 128>}, {pipeline_mode = #tpu.pipeline_mode<synchronous>, transform_indices = @transform_2, window_bounds = array<i64: 1, 128>}, {pipeline_mode = #tpu.pipeline_mode<synchronous>, transform_indices = @transform_3, window_bounds = array<i64: 128, 128>}, {pipeline_mode = #tpu.pipeline_mode<synchronous>, transform_indices = @transform_4, window_bounds = array<i64: 1, 128>}, {pipeline_mode = #tpu.pipeline_mode<synchronous>, transform_indices = @transform_5, window_bounds = array<i64: 128, 128>}, {pipeline_mode = #tpu.pipeline_mode<synchronous>, transform_indices = @transform_6, window_bounds = array<i64: 1, 128>}, {transform_indices = @transform_7, window_bounds = array<i64: 16, 128>}]} {
    %c0 = arith.constant 0 : index
    %c0_0 = arith.constant 0 : index
    %0 = vector.load %arg1[%c0, %c0_0] : memref<16x128xf32, #tpu.memory_space<vmem>>, vector<16x128xf32>
    %1 = tpu.iota {dimensions = array<i32: 1>} : vector<16x128xi32>
    %c32_i32 = arith.constant 32 : i32
    %2 = vector.broadcast %c32_i32 : i32 to vector<16x128xi32>
    %3 = arith.cmpi slt, %1, %2 : vector<16x128xi32>
    %4 = arith.extui %3 : vector<16x128xi1> to vector<16x128xi32>
    %5 = arith.sitofp %4 : vector<16x128xi32> to vector<16x128xf32>
    %6 = arith.mulf %0, %5 : vector<16x128xf32>
    %cst = arith.constant dense<0.000000e+00> : vector<16xf32>
    %7 = vector.multi_reduction <add>, %6, %cst [1] : vector<16x128xf32> to vector<16xf32>
    %8 = vector.shape_cast %7 : vector<16xf32> to vector<16x1xf32>
    %cst_1 = arith.constant 3.125000e-02 : f32
    %9 = vector.broadcast %cst_1 : f32 to vector<16x1xf32>
    %10 = arith.mulf %8, %9 : vector<16x1xf32>
    %11 = vector.broadcast %10 : vector<16x1xf32> to vector<16x128xf32>
    %12 = arith.subf %6, %11 : vector<16x128xf32>
    %13 = arith.mulf %12, %5 : vector<16x128xf32>
    %14 = arith.mulf %13, %13 : vector<16x128xf32>
    %cst_2 = arith.constant dense<0.000000e+00> : vector<16xf32>
    %15 = vector.multi_reduction <add>, %14, %cst_2 [1] : vector<16x128xf32> to vector<16xf32>
    %16 = vector.shape_cast %15 : vector<16xf32> to vector<16x1xf32>
    %cst_3 = arith.constant 3.125000e-02 : f32
    %17 = vector.broadcast %cst_3 : f32 to vector<16x1xf32>
    %18 = arith.mulf %16, %17 : vector<16x1xf32>
    %cst_4 = arith.constant 9.99999997E-7 : f32
    %19 = vector.broadcast %cst_4 : f32 to vector<16x1xf32>
    %20 = arith.addf %18, %19 : vector<16x1xf32>
    %21 = math.rsqrt %20 : vector<16x1xf32>
    %22 = vector.broadcast %21 : vector<16x1xf32> to vector<16x128xf32>
    %23 = arith.mulf %13, %22 : vector<16x128xf32>
    %c0_5 = arith.constant 0 : index
    %c0_6 = arith.constant 0 : index
    %24 = vector.load %arg2[%c0_5, %c0_6] : memref<1x128xf32, #tpu.memory_space<vmem>>, vector<1x128xf32>
    %25 = vector.broadcast %24 : vector<1x128xf32> to vector<16x128xf32>
    %26 = arith.mulf %23, %25 : vector<16x128xf32>
    %c0_7 = arith.constant 0 : index
    %c0_8 = arith.constant 0 : index
    %27 = vector.load %arg3[%c0_7, %c0_8] : memref<1x128xf32, #tpu.memory_space<vmem>>, vector<1x128xf32>
    %28 = vector.broadcast %27 : vector<1x128xf32> to vector<16x128xf32>
    %29 = arith.addf %26, %28 : vector<16x128xf32>
    %30 = arith.truncf %29 : vector<16x128xf32> to vector<16x128xbf16>
    %c0_9 = arith.constant 0 : index
    %c0_10 = arith.constant 0 : index
    %31 = vector.load %arg4[%c0_9, %c0_10] : memref<128x128xbf16, #tpu.memory_space<vmem>>, vector<128x128xbf16>
    %cst_11 = arith.constant dense<0.000000e+00> : vector<16x128xf32>
    %32 = tpu.matmul %30, %31, %cst_11 {dimension_numbers = #tpu.dot_dimension_numbers<[1], [0], [0], [1], [0, 0, 1, 1], [], []>} : vector<16x128xbf16>, vector<128x128xbf16>, vector<16x128xf32> -> vector<16x128xf32>
    %c0_12 = arith.constant 0 : index
    %c0_13 = arith.constant 0 : index
    %33 = vector.load %arg5[%c0_12, %c0_13] : memref<1x128xf32, #tpu.memory_space<vmem>>, vector<1x128xf32>
    %34 = vector.broadcast %33 : vector<1x128xf32> to vector<16x128xf32>
    %35 = arith.addf %32, %34 : vector<16x128xf32>
    %36 = arith.mulf %35, %35 : vector<16x128xf32>
    %cst_14 = arith.constant 4.471500e-02 : f32
    %37 = vector.broadcast %cst_14 : f32 to vector<16x128xf32>
    %38 = arith.mulf %37, %36 : vector<16x128xf32>
    %cst_15 = arith.constant 1.000000e+00 : f32
    %39 = vector.broadcast %cst_15 : f32 to vector<16x128xf32>
    %40 = arith.addf %39, %38 : vector<16x128xf32>
    %41 = arith.mulf %35, %40 : vector<16x128xf32>
    %cst_16 = arith.constant 5.000000e-01 : f32
    %42 = vector.broadcast %cst_16 : f32 to vector<16x128xf32>
    %43 = arith.mulf %42, %35 : vector<16x128xf32>
    %cst_17 = arith.constant 0.797884583 : f32
    %44 = vector.broadcast %cst_17 : f32 to vector<16x128xf32>
    %45 = arith.mulf %44, %41 : vector<16x128xf32>
    %46 = math.tanh %45 : vector<16x128xf32>
    %cst_18 = arith.constant 1.000000e+00 : f32
    %47 = vector.broadcast %cst_18 : f32 to vector<16x128xf32>
    %48 = arith.addf %47, %46 : vector<16x128xf32>
    %49 = arith.mulf %43, %48 : vector<16x128xf32>
    %50 = arith.truncf %49 : vector<16x128xf32> to vector<16x128xbf16>
    %c0_19 = arith.constant 0 : index
    %c0_20 = arith.constant 0 : index
    %51 = vector.load %arg6[%c0_19, %c0_20] : memref<128x128xbf16, #tpu.memory_space<vmem>>, vector<128x128xbf16>
    %cst_21 = arith.constant dense<0.000000e+00> : vector<16x128xf32>
    %52 = tpu.matmul %50, %51, %cst_21 {dimension_numbers = #tpu.dot_dimension_numbers<[1], [0], [0], [1], [0, 0, 1, 1], [], []>} : vector<16x128xbf16>, vector<128x128xbf16>, vector<16x128xf32> -> vector<16x128xf32>
    %c0_22 = arith.constant 0 : index
    %c0_23 = arith.constant 0 : index
    %53 = vector.load %arg7[%c0_22, %c0_23] : memref<1x128xf32, #tpu.memory_space<vmem>>, vector<1x128xf32>
    %54 = vector.broadcast %53 : vector<1x128xf32> to vector<16x128xf32>
    %55 = arith.addf %52, %54 : vector<16x128xf32>
    %56 = arith.addf %55, %0 : vector<16x128xf32>
    %c0_24 = arith.constant 0 : index
    %c0_25 = arith.constant 0 : index
    %57 = vector.load %arg8[%c0_24, %c0_25] : memref<16x128xf32, #tpu.memory_space<vmem>>, vector<16x128xf32>
    tpu.vector_store %arg8[%c0_24, %c0_25], %56 {strides = array<i32>} : memref<16x128xf32, #tpu.memory_space<vmem>>, vector<16x128xf32>,
    return
  }
  func.func @transform_0(%arg0: i32) -> (i32, i32) {
    %c0_i32 = arith.constant 0 : i32
    %c0_i32_0 = arith.constant 0 : i32
    return %arg0, %c0_i32 : i32, i32
  }
  func.func @transform_1(%arg0: i32) -> (i32, i32) {
    %c0_i32 = arith.constant 0 : i32
    %c0_i32_0 = arith.constant 0 : i32
    %c0_i32_1 = arith.constant 0 : i32
    return %c0_i32, %c0_i32_0 : i32, i32
  }
  func.func @transform_2(%arg0: i32) -> (i32, i32) {
    %c0_i32 = arith.constant 0 : i32
    %c0_i32_0 = arith.constant 0 : i32
    %c0_i32_1 = arith.constant 0 : i32
    return %c0_i32, %c0_i32_0 : i32, i32
  }
  func.func @transform_3(%arg0: i32) -> (i32, i32) {
    %c0_i32 = arith.constant 0 : i32
    %c0_i32_0 = arith.constant 0 : i32
    %c0_i32_1 = arith.constant 0 : i32
    return %c0_i32, %c0_i32_0 : i32, i32
  }
  func.func @transform_4(%arg0: i32) -> (i32, i32) {
    %c0_i32 = arith.constant 0 : i32
    %c0_i32_0 = arith.constant 0 : i32
    %c0_i32_1 = arith.constant 0 : i32
    return %c0_i32, %c0_i32_0 : i32, i32
  }
  func.func @transform_5(%arg0: i32) -> (i32, i32) {
    %c0_i32 = arith.constant 0 : i32
    %c0_i32_0 = arith.constant 0 : i32
    %c0_i32_1 = arith.constant 0 : i32
    return %c0_i32, %c0_i32_0 : i32, i32
  }
  func.func @transform_6(%arg0: i32) -> (i32, i32) {
    %c0_i32 = arith.constant 0 : i32
    %c0_i32_0 = arith.constant 0 : i32
    %c0_i32_1 = arith.constant 0 : i32
    return %c0_i32, %c0_i32_0 : i32, i32
  }
  func.func @transform_7(%arg0: i32) -> (i32, i32) {
    %c0_i32 = arith.constant 0 : i32
    %c0_i32_0 = arith.constant 0 : i32
    return %arg0, %c0_i32 : i32, i32
  }
}

</mosaic_0001>

<llo_original>
// kernel: feed_forward.1
$region0: #{feed_forward.1}
  #allocation0 [shape = 'u32[]', space=smem, size = 0x4, offset = 0x4, fixed_abs, tag = 'smem constant byte address 0x4 - core index']
  #allocation1 [shape = 'u32[144,128]{1,0:T(1,128)}', space=vmem, size = 0x12000, scoped, tag = 'internal scratch']
  %s0 = inlined_call_operand.vmem [shape: f32[16,128], index: 0, kind: input, shape index: {}]
  %s1 = inlined_call_operand.vmem [shape: f32[1,128], index: 1, kind: input, shape index: {}]
  %s2 = inlined_call_operand.vmem [shape: f32[1,128], index: 2, kind: input, shape index: {}]
  %s3 = inlined_call_operand.vmem [shape: bf16[128,128], index: 3, kind: input, shape index: {}]
  %s4 = inlined_call_operand.vmem [shape: f32[1,128], index: 4, kind: input, shape index: {}]
  %s5 = inlined_call_operand.vmem [shape: bf16[128,128], index: 5, kind: input, shape index: {}]
  %s6 = inlined_call_operand.vmem [shape: f32[1,128], index: 6, kind: input, shape index: {}]
  %s7 = inlined_call_operand.vmem [shape: f32[16,128], index: 7, kind: output, shape index: {}]
  %s8 = sld [smem:[#allocation0]]
  $region38: #{feed_forward.1} parent=0
    _
  %s10 = ssub.s32 1, %s8
  %s11 = scalar_select 0, %s10, %s8
  // Predicated region
  $region2: #{feed_forward.1} parent=0 // pred_check
    _
  $region3: #{feed_forward.1} parent=0 // pred_check_branch
    %13 = sbr.rel (0) target = $region5
  $region4: #{feed_forward.1} parent=0 // pred_region
    _
  $region5: #{feed_forward.1} parent=0 // pred_fallthru
    _
  // Predicated region
  $region6: #{feed_forward.1} parent=0 // pred_check
    _
  $region7: #{feed_forward.1} parent=0 // pred_check_branch
    %15 = sbr.rel (0) target = $region9
  $region8: #{feed_forward.1} parent=0 // pred_region
    _
  $region9: #{feed_forward.1} parent=0 // pred_fallthru
    _
  // Predicated region
  $region10: #{feed_forward.1} parent=0 // pred_check
    _
  $region11: #{feed_forward.1} parent=0 // pred_check_branch
    %17 = sbr.rel (0) target = $region13
  $region12: #{feed_forward.1} parent=0 // pred_region
    _
  $region13: #{feed_forward.1} parent=0 // pred_fallthru
    _
  // Predicated region
  $region14: #{feed_forward.1} parent=0 // pred_check
    _
  $region15: #{feed_forward.1} parent=0 // pred_check_branch
    %19 = sbr.rel (0) target = $region17
  $region16: #{feed_forward.1} parent=0 // pred_region
    _
  $region17: #{feed_forward.1} parent=0 // pred_fallthru
    _
  // Predicated region
  $region18: #{feed_forward.1} parent=0 // pred_check
    _
  $region19: #{feed_forward.1} parent=0 // pred_check_branch
    %21 = sbr.rel (0) target = $region21
  $region20: #{feed_forward.1} parent=0 // pred_region
    _
  $region21: #{feed_forward.1} parent=0 // pred_fallthru
    _
  // Predicated region
  $region22: #{feed_forward.1} parent=0 // pred_check
    _
  $region23: #{feed_forward.1} parent=0 // pred_check_branch
    %23 = sbr.rel (0) target = $region25
  $region24: #{feed_forward.1} parent=0 // pred_region
    _
  $region25: #{feed_forward.1} parent=0 // pred_fallthru
    _
  // Predicated region
  $region26: #{feed_forward.1} parent=0 // pred_check
    _
  $region27: #{feed_forward.1} parent=0 // pred_check_branch
    %25 = sbr.rel (0) target = $region29
  $region28: #{feed_forward.1} parent=0 // pred_region
    _
  $region29: #{feed_forward.1} parent=0 // pred_fallthru
    _
  %v27 = vld [vmem:[%s0] sm:$0xff]
  %v28 = vld [vmem:[%s0 + $0x8] sm:$0xff]
  %v29 = vlaneseq
  %v30 = vand.u32 %v29, 127
  %vm31 = vcmp.lt.s32.totalorder %v30, 32
  %v32 = vsel %vm31, 1, 0
  %v33 = vcvt.s32.f32 %v32
  %v34 = vmul.f32 %v27, %v33
  %v35 = vmul.f32 %v28, %v33
  %36 = vadd.xlane.f32.xlu0 %v34
  %v37 = vpop.xlane.xlu0 %36
  %38 = vadd.xlane.f32.xlu0 %v35
  %v39 = vpop.xlane.xlu0 %38
  %v40 = vmul.f32 %v37, 0.03125
  %v41 = vmul.f32 %v39, 0.03125
  %v42 = vsub.f32 %v34, %v40
  %v43 = vsub.f32 %v35, %v41
  %v44 = vmul.f32 %v42, %v33
  %v45 = vmul.f32 %v43, %v33
  %v46 = vmul.f32 %v44, %v44
  %v47 = vmul.f32 %v45, %v45
  %48 = vadd.xlane.f32.xlu0 %v46
  %v49 = vpop.xlane.xlu0 %48
  %50 = vadd.xlane.f32.xlu0 %v47
  %v51 = vpop.xlane.xlu0 %50
  %v52 = vmul.f32 %v49, 0.03125
  %v53 = vmul.f32 %v51, 0.03125
  %v54 = vadd.f32 %v52, 1e-06
  %v55 = vadd.f32 %v53, 1e-06
  %v56 = vrsqrt.pop %v54
  %v57 = vrsqrt.pop %v55
  %v58 = vmul.f32 %v44, %v56
  %v59 = vmul.f32 %v45, %v57
  %v60 = vld [vmem:[%s1] sm:$0x1]
  %v62 = vlaneseq
  %v63 = vshrl.u32 %v62, 7
  %v64 = vsub.s32 0, %v63
  %v65 = vrot.slane %v60, %v64
  %v67 = vmul.f32 %v58, %v65
  %v68 = vmul.f32 %v59, %v65
  %v69 = vld [vmem:[%s2] sm:$0x1]
  %v71 = vlaneseq
  %v72 = vshrl.u32 %v71, 7
  %v73 = vsub.s32 0, %v72
  %v74 = vrot.slane %v69, %v73
  %v76 = vadd.f32 %v67, %v74
  %v77 = vadd.f32 %v68, %v74
  %v78 = vpack.c.bf16 %v77, %v76
  %v79 = vld [vmem:[%s3] sm:$0xf]
  %v80 = vld [vmem:[%s3 + $0x4] sm:$0xf]
  %v81 = vld [vmem:[%s3 + $0x8] sm:$0xf]
  %v82 = vld [vmem:[%s3 + $0xc] sm:$0xf]
  %v83 = vld [vmem:[%s3 + $0x10] sm:$0xf]
  %v84 = vld [vmem:[%s3 + $0x14] sm:$0xf]
  %v85 = vld [vmem:[%s3 + $0x18] sm:$0xf]
  %v86 = vld [vmem:[%s3 + $0x1c] sm:$0xf]
  %v87 = vld [vmem:[%s3 + $0x20] sm:$0xf]
  %v88 = vld [vmem:[%s3 + $0x24] sm:$0xf]
  %v89 = vld [vmem:[%s3 + $0x28] sm:$0xf]
  %v90 = vld [vmem:[%s3 + $0x2c] sm:$0xf]
  %v91 = vld [vmem:[%s3 + $0x30] sm:$0xf]
  %v92 = vld [vmem:[%s3 + $0x34] sm:$0xf]
  %v93 = vld [vmem:[%s3 + $0x38] sm:$0xf]
  %v94 = vld [vmem:[%s3 + $0x3c] sm:$0xf]
  %v95 = vld [vmem:[%s4] sm:$0x1]
  %v97 = vlaneseq
  %v98 = vshrl.u32 %v97, 7
  %v99 = vsub.s32 0, %v98
  %v100 = vrot.slane %v95, %v99
  %v118 = vunpack.c.l.b16 %v79
  %v119 = vunpack.c.l.b16 %v80
  %v120 = vunpack.c.l.b16 %v81
  %v121 = vunpack.c.l.b16 %v82
  %v122 = vunpack.c.l.b16 %v83
  %v123 = vunpack.c.l.b16 %v84
  %v124 = vunpack.c.l.b16 %v85
  %v125 = vunpack.c.l.b16 %v86
  %v126 = vunpack.c.l.b16 %v87
  %v127 = vunpack.c.l.b16 %v88
  %v128 = vunpack.c.l.b16 %v89
  %v129 = vunpack.c.l.b16 %v90
  %v130 = vunpack.c.l.b16 %v91
  %v131 = vunpack.c.l.b16 %v92
  %v132 = vunpack.c.l.b16 %v93
  %v133 = vunpack.c.l.b16 %v94
  %v134 = vpack.c.b16 %v119, %v118
  %v135 = vpack.c.b16 %v121, %v120
  %v136 = vpack.c.b16 %v123, %v122
  %v137 = vpack.c.b16 %v125, %v124
  %v138 = vpack.c.b16 %v127, %v126
  %v139 = vpack.c.b16 %v129, %v128
  %v140 = vpack.c.b16 %v131, %v130
  %v141 = vpack.c.b16 %v133, %v132
  %150 = vmatprep.subr.bf16.mxu0 0
  %151 = vmatpush1.bf16.msra.mxu0 %v134
  %152 = vmatprep.subr.bf16.mxu0 0
  %153 = vmatpush1.bf16.msra.mxu0 %v135
  %154 = vmatprep.subr.bf16.mxu0 0
  %155 = vmatpush1.bf16.msra.mxu0 %v136
  %156 = vmatprep.subr.bf16.mxu0 0
  %157 = vmatpush1.bf16.msra.mxu0 %v137
  %158 = vmatprep.subr.bf16.mxu0 0
  %159 = vmatpush1.bf16.msra.mxu0 %v138
  %160 = vmatprep.subr.bf16.mxu0 0
  %161 = vmatpush1.bf16.msra.mxu0 %v139
  %162 = vmatprep.subr.bf16.mxu0 0
  %163 = vmatpush1.bf16.msra.mxu0 %v140
  %164 = vmatprep.subr.bf16.mxu0 0
  %165 = vmatpush1.bf16.msra.mxu0 %v141
  %166 = vmatprep.subr.bf16.mxu0 0
  %167 = vmatpush1.bf16.msra.mxu0 0
  %168 = vmatprep.subr.bf16.mxu0 0
  %169 = vmatpush1.bf16.msra.mxu0 0
  %170 = vmatprep.subr.bf16.mxu0 0
  %171 = vmatpush1.bf16.msra.mxu0 0
  %172 = vmatprep.subr.bf16.mxu0 0
  %173 = vmatpush1.bf16.msra.mxu0 0
  %174 = vmatprep.subr.bf16.mxu0 0
  %175 = vmatpush1.bf16.msra.mxu0 0
  %176 = vmatprep.subr.bf16.mxu0 0
  %177 = vmatpush1.bf16.msra.mxu0 0
  %178 = vmatprep.subr.bf16.mxu0 0
  %179 = vmatpush1.bf16.msra.mxu0 0
  %180 = vmatprep.subr.bf16.mxu0 0
  %181 = vmatpush1.bf16.msra.mxu0 0
  %182 = vmatprep.mubr.bf16.mxu0 0
  %183 = vmatmul.mubr.bf16.gmra.mrb[0].mxu0 %v78
  %v184 = vpop.f32.mrb[0].mxu0
  %v185 = vadd.f32 %v100, %v184
  %v186 = vpop.f32.mrb[0].mxu0
  %v187 = vpop.f32.mrb[0].mxu0
  %v188 = vadd.f32 %v100, %v187
  %v189 = vpop.f32.mrb[0].mxu0
  %190 = vdwg.mxu0
  %v191 = vmul.f32 %v185, %v185
  %v192 = vmul.f32 %v188, %v188
  %v193 = vmul.f32 %v191, 0.044715
  %v194 = vmul.f32 %v192, 0.044715
  %v195 = vadd.f32 %v193, 1.0
  %v196 = vadd.f32 %v194, 1.0
  %v197 = vmul.f32 %v185, %v195
  %v198 = vmul.f32 %v188, %v196
  %v199 = vmul.f32 %v185, 0.5
  %v200 = vmul.f32 %v188, 0.5
  %v201 = vmul.f32 %v197, 0.7978846
  %v202 = vmul.f32 %v198, 0.7978846
  %v203 = vtanh.pop %v201
  %v204 = vtanh.pop %v202
  %v205 = vadd.f32 %v203, 1.0
  %v206 = vadd.f32 %v204, 1.0
  %v207 = vmul.f32 %v199, %v205
  %v208 = vmul.f32 %v200, %v206
  %v209 = vpack.c.bf16 %v208, %v207
  %v210 = vld [vmem:[%s5] sm:$0xf]
  %v211 = vld [vmem:[%s5 + $0x4] sm:$0xf]
  %v212 = vld [vmem:[%s5 + $0x8] sm:$0xf]
  %v213 = vld [vmem:[%s5 + $0xc] sm:$0xf]
  %v214 = vld [vmem:[%s5 + $0x10] sm:$0xf]
  %v215 = vld [vmem:[%s5 + $0x14] sm:$0xf]
  %v216 = vld [vmem:[%s5 + $0x18] sm:$0xf]
  %v217 = vld [vmem:[%s5 + $0x1c] sm:$0xf]
  %v218 = vld [vmem:[%s5 + $0x20] sm:$0xf]
  %v219 = vld [vmem:[%s5 + $0x24] sm:$0xf]
  %v220 = vld [vmem:[%s5 + $0x28] sm:$0xf]
  %v221 = vld [vmem:[%s5 + $0x2c] sm:$0xf]
  %v222 = vld [vmem:[%s5 + $0x30] sm:$0xf]
  %v223 = vld [vmem:[%s5 + $0x34] sm:$0xf]
  %v224 = vld [vmem:[%s5 + $0x38] sm:$0xf]
  %v225 = vld [vmem:[%s5 + $0x3c] sm:$0xf]
  %v226 = vld [vmem:[%s6] sm:$0x1]
  %v228 = vlaneseq
  %v229 = vshrl.u32 %v228, 7
  %v230 = vsub.s32 0, %v229
  %v231 = vrot.slane %v226, %v230
  %v249 = vunpack.c.l.b16 %v210
  %v250 = vunpack.c.l.b16 %v211
  %v251 = vunpack.c.l.b16 %v212
  %v252 = vunpack.c.l.b16 %v213
  %v253 = vunpack.c.l.b16 %v214
  %v254 = vunpack.c.l.b16 %v215
  %v255 = vunpack.c.l.b16 %v216
  %v256 = vunpack.c.l.b16 %v217
  %v257 = vunpack.c.l.b16 %v218
  %v258 = vunpack.c.l.b16 %v219
  %v259 = vunpack.c.l.b16 %v220
  %v260 = vunpack.c.l.b16 %v221
  %v261 = vunpack.c.l.b16 %v222
  %v262 = vunpack.c.l.b16 %v223
  %v263 = vunpack.c.l.b16 %v224
  %v264 = vunpack.c.l.b16 %v225
  %v265 = vpack.c.b16 %v250, %v249
  %v266 = vpack.c.b16 %v252, %v251
  %v267 = vpack.c.b16 %v254, %v253
  %v268 = vpack.c.b16 %v256, %v255
  %v269 = vpack.c.b16 %v258, %v257
  %v270 = vpack.c.b16 %v260, %v259
  %v271 = vpack.c.b16 %v262, %v261
  %v272 = vpack.c.b16 %v264, %v263
  %281 = vmatprep.subr.bf16.mxu0 0
  %282 = vmatpush1.bf16.msra.mxu0 %v265
  %283 = vmatprep.subr.bf16.mxu0 0
  %284 = vmatpush1.bf16.msra.mxu0 %v266
  %285 = vmatprep.subr.bf16.mxu0 0
  %286 = vmatpush1.bf16.msra.mxu0 %v267
  %287 = vmatprep.subr.bf16.mxu0 0
  %288 = vmatpush1.bf16.msra.mxu0 %v268
  %289 = vmatprep.subr.bf16.mxu0 0
  %290 = vmatpush1.bf16.msra.mxu0 %v269
  %291 = vmatprep.subr.bf16.mxu0 0
  %292 = vmatpush1.bf16.msra.mxu0 %v270
  %293 = vmatprep.subr.bf16.mxu0 0
  %294 = vmatpush1.bf16.msra.mxu0 %v271
  %295 = vmatprep.subr.bf16.mxu0 0
  %296 = vmatpush1.bf16.msra.mxu0 %v272
  %297 = vmatprep.subr.bf16.mxu0 0
  %298 = vmatpush1.bf16.msra.mxu0 0
  %299 = vmatprep.subr.bf16.mxu0 0
  %300 = vmatpush1.bf16.msra.mxu0 0
  %301 = vmatprep.subr.bf16.mxu0 0
  %302 = vmatpush1.bf16.msra.mxu0 0
  %303 = vmatprep.subr.bf16.mxu0 0
  %304 = vmatpush1.bf16.msra.mxu0 0
  %305 = vmatprep.subr.bf16.mxu0 0
  %306 = vmatpush1.bf16.msra.mxu0 0
  %307 = vmatprep.subr.bf16.mxu0 0
  %308 = vmatpush1.bf16.msra.mxu0 0
  %309 = vmatprep.subr.bf16.mxu0 0
  %310 = vmatpush1.bf16.msra.mxu0 0
  %311 = vmatprep.subr.bf16.mxu0 0
  %312 = vmatpush1.bf16.msra.mxu0 0
  %313 = vmatprep.mubr.bf16.mxu0 0
  %314 = vmatmul.mubr.bf16.gmra.mrb[0].mxu0 %v209
  %v315 = vpop.f32.mrb[0].mxu0
  %v316 = vadd.f32 %v231, %v315
  %v317 = vpop.f32.mrb[0].mxu0
  %v318 = vpop.f32.mrb[0].mxu0
  %v319 = vadd.f32 %v231, %v318
  %v320 = vpop.f32.mrb[0].mxu0
  %321 = vdwg.mxu0
  %v322 = vadd.f32 %v316, %v27
  %v323 = vadd.f32 %v319, %v28
  %324 = vst [vmem:[%s7] sm:$0xff] %v322
  %325 = vst [vmem:[%s7 + $0x8] sm:$0xff] %v323
  // Predicated region
  $region30: #{feed_forward.1} parent=0 // pred_check
    _
  $region31: #{feed_forward.1} parent=0 // pred_check_branch
    %327 = sbr.rel (0) target = $region33
  $region32: #{feed_forward.1} parent=0 // pred_region
    _
  $region33: #{feed_forward.1} parent=0 // pred_fallthru
    _
  // Predicated region
  $region34: #{feed_forward.1} parent=0 // pred_check
    _
  $region35: #{feed_forward.1} parent=0 // pred_check_branch
    %329 = sbr.rel (0) target = $region37
  $region36: #{feed_forward.1} parent=0 // pred_region
    _
  $region37: #{feed_forward.1} parent=0 // pred_fallthru
    _

</llo_original>
